<compile_context>
chip_gen: v5e
topology: v5e:2x2
jax: 0.10.0
libtpu: 0.0.40
codegen_flags: <defaults>
</compile_context>

<pallas_src>
import functools

import jax
import jax.numpy as jnp
from jax.experimental import pallas as pl
from jax.experimental.pallas import tpu as pltpu


def _round_up(x, m):
    return (x + m - 1) // m * m


def _pwff_kernel(x_ref, w1_ref, b1_ref, w2_ref, b2_ref, o_ref, *,
                 mxu_dtype, valid_cols):
    # x_ref:  (tm, H)   current row tile (io dtype), H = true hidden size
    # w1_ref: (H,  Hp)  first linear weight, pre-transposed (y = x @ w + b)
    # b1_ref: (1,  Hp)  f32
    # w2_ref: (Hp, Hp)
    # b2_ref: (1,  Hp)  f32
    # o_ref:  (tm, Hp)  lane-dense output tile
    x = x_ref[...]                                            # read x once
    h1 = jnp.dot(x.astype(mxu_dtype), w1_ref[...],
                 preferred_element_type=jnp.float32)          # (tm, Hp)
    h1 = jnp.maximum(h1 + b1_ref[...], 0.0)                   # bias + ReLU, f32
    y = jnp.dot(h1.astype(mxu_dtype), w2_ref[...],
                preferred_element_type=jnp.float32)
    y = y + b2_ref[...]
    # Dropout (eval mode) == identity; residual add fused into the store.
    hp = o_ref.shape[-1]
    if valid_cols == hp:
        o_ref[...] = (y + x.astype(jnp.float32)).astype(o_ref.dtype)
    else:
        # Full lane-dense store first (pad lanes of y are exactly zero because
        # the weight/bias pads are zero), then overwrite the first H lanes with
        # the residual-added values (cheap masked VMEM store).
        o_ref[...] = y.astype(o_ref.dtype)
        o_ref[:, :valid_cols] = (
            y[:, :valid_cols] + x.astype(jnp.float32)).astype(o_ref.dtype)


@functools.partial(jax.jit,
                   static_argnames=("block_rows", "mxu_dtype", "io_dtype"))
def pointwise_feedforward(x, w1, b1, w2, b2, *, block_rows=4096,
                          mxu_dtype=jnp.bfloat16, io_dtype=None):
    """x: (B, S, H). w1/w2: (H, H) pre-transposed so y = x @ w + b. b*: (1, H).

    io_dtype: optional narrower dtype for activation HBM traffic (e.g.
    jnp.bfloat16).  None keeps x.dtype end to end (module-exact semantics).
    Output dtype == io_dtype (or x.dtype when None).
    """
    B, S, H = x.shape
    N = B * S
    cdtype = jnp.dtype(io_dtype) if io_dtype is not None else jnp.dtype(x.dtype)
    w_dt = jnp.dtype(mxu_dtype)
    Hp = _round_up(max(H, 1), 128)           # lane-dense output width

    # Activations: pure reshape (and optional cast), NO HBM-side padding.
    x2d = x.reshape(N, H)
    if cdtype != x2d.dtype:
        x2d = x2d.astype(cdtype)

    # Weights/biases: zero-pad hidden dim up to Hp (tiny, grid-invariant).
    w1p = jnp.pad(w1, ((0, 0), (0, Hp - H))).astype(w_dt)          # (H,  Hp)
    w2p = jnp.pad(w2, ((0, Hp - H), (0, Hp - H))).astype(w_dt)     # (Hp, Hp)
    b1p = jnp.pad(b1.reshape(1, H), ((0, 0), (0, Hp - H))).astype(jnp.float32)
    b2p = jnp.pad(b2.reshape(1, H), ((0, 0), (0, Hp - H))).astype(jnp.float32)

    # ---- tile-size selection -------------------------------------------------
    io_b = cdtype.itemsize
    w_b = w_dt.itemsize
    try:
        vmem_total = int(pltpu.get_tpu_info().vmem_capacity_bytes)
    except Exception:            # pragma: no cover - conservative fallback
        vmem_total = 64 << 20    # v7x-safe
    vmem_budget = min(vmem_total - (16 << 20), 96 << 20)

    # double-buffered x tile + out tile + f32 intermediates (h1, y), per row
    per_row = 2 * H * io_b + 2 * Hp * io_b + 2 * Hp * 4
    # grid-invariant weights are still double-buffered by the pipeline
    fixed = 2 * (H * Hp + Hp * Hp) * w_b + 4 * Hp * 4
    # TODO(synk): for H >= ~1024 DMA the weights once into VMEM scratch
    # (memory_space=pl.ANY) instead of relying on double-buffered BlockSpecs.
    tm_vmem = max(((vmem_budget - fixed) // max(per_row, 1)) // 8 * 8, 8)

    tm = max(8, min(_round_up(block_rows, 8),
                    _round_up(pl.cdiv(N, 2), 8),   # >=2 steps -> both v7x TCs
                    tm_vmem))
    grid = (pl.cdiv(N, tm),)                        # ragged last block is OK

    est = fixed + per_row * tm
    vmem_limit = int(max(min(est + (16 << 20), vmem_total - (2 << 20)),
                         16 << 20))

    flops = 2 * N * (H * Hp + Hp * Hp)
    bytes_accessed = int(N * H * io_b + N * Hp * io_b
                         + (H * Hp + Hp * Hp) * w_b + 2 * Hp * 4)

    # Donate the kernel input buffer only when it is a fresh cast temp (a pure
    # reshape of the caller's array would force XLA to insert a copy instead).
    alias = {0: 0} if (Hp == H and cdtype != x.dtype) else {}

    out2d = pl.pallas_call(
        functools.partial(_pwff_kernel, mxu_dtype=w_dt, valid_cols=H),
        out_shape=jax.ShapeDtypeStruct((N, Hp), cdtype),
        grid_spec=pltpu.PrefetchScalarGridSpec(
            num_scalar_prefetch=0,
            grid=grid,
            in_specs=[
                pl.BlockSpec((tm, H), lambda i: (i, 0)),    # x row tile
                pl.BlockSpec((H, Hp), lambda i: (0, 0)),    # w1 (grid-invariant)
                pl.BlockSpec((1, Hp), lambda i: (0, 0)),    # b1
                pl.BlockSpec((Hp, Hp), lambda i: (0, 0)),   # w2 (grid-invariant)
                pl.BlockSpec((1, Hp), lambda i: (0, 0)),    # b2
            ],
            out_specs=pl.BlockSpec((tm, Hp), lambda i: (i, 0)),
        ),
        compiler_params=pltpu.CompilerParams(
            dimension_semantics=("parallel",),   # row axis across v7x's 2 TCs
            vmem_limit_bytes=vmem_limit),
        cost_estimate=pl.CostEstimate(
            flops=flops, bytes_accessed=bytes_accessed, transcendentals=0),
        input_output_aliases=alias,
    )(x2d, w1p, b1p, w2p, b2p)

    if Hp != H:
        out2d = out2d[:, :H]
    return out2d.reshape(B, S, H)


def init_params(key, hidden_units, dtype=jnp.float32):
    """Deterministic init matching nn.Linear(H, H) shapes.

    PyTorch stores Linear weight as (out, in) and computes y = x @ W.T + b;
    here weights are pre-transposed so the kernel computes y = x @ w + b.
    """
    k1, k2, k3, k4 = jax.random.split(key, 4)
    bound = 1.0 / (hidden_units ** 0.5)
    w1_t = jax.random.uniform(k1, (hidden_units, hidden_units), dtype,
                              minval=-bound, maxval=bound)   # = W1.T
    b1 = jax.random.uniform(k2, (1, hidden_units), dtype,
                            minval=-bound, maxval=bound)
    w2_t = jax.random.uniform(k3, (hidden_units, hidden_units), dtype,
                              minval=-bound, maxval=bound)   # = W2.T
    b2 = jax.random.uniform(k4, (1, hidden_units), dtype,
                            minval=-bound, maxval=bound)
    return w1_t, b1, w2_t, b2


def _reference(x, w1, b1, w2, b2):
    hi = jax.lax.Precision.HIGHEST
    h = jnp.maximum(jnp.dot(x, w1, precision=hi) + b1, 0.0)
    return jnp.dot(h, w2, precision=hi) + b2 + x


if __name__ == "__main__":
    key = jax.random.PRNGKey(0)

    def make(k, B, S, H):
        kx, kp = jax.random.split(k)
        x = jax.random.normal(kx, (B, S, H), dtype=jnp.float32)
        return x, init_params(kp, H)

    # 1) Small non-128-multiple H, f32 MXU path: tight check.
    x, (w1, b1, w2, b2) = make(jax.random.fold_in(key, 0), 2, 8, 32)
    ref = _reference(x, w1, b1, w2, b2)
    out = jax.block_until_ready(pointwise_feedforward(
        x, w1, b1, w2, b2, mxu_dtype=jnp.float32))
    assert out.shape == x.shape and out.dtype == x.dtype
    assert jnp.allclose(out, ref, atol=1e-3, rtol=1e-3), "f32 path mismatch (H=32)"

    # 2) Realistic SASRec hidden size H=50, default bf16-MXU / f32-IO path.
    x, (w1, b1, w2, b2) = make(jax.random.fold_in(key, 1), 2, 8, 50)
    ref = _reference(x, w1, b1, w2, b2)
    out = jax.block_until_ready(pointwise_feedforward(x, w1, b1, w2, b2))
    assert out.shape == x.shape
    assert jnp.allclose(out, ref, atol=1e-1, rtol=5e-2), "bf16 MXU mismatch (H=50)"

    # 3) 128-aligned H, ragged row count (N=21 not a tile multiple), bf16 I/O
    #    (halved activation HBM traffic) + input/output buffer aliasing.
    x, (w1, b1, w2, b2) = make(jax.random.fold_in(key, 2), 3, 7, 128)
    ref = _reference(x, w1, b1, w2, b2)
    out = jax.block_until_ready(pointwise_feedforward(
        x, w1, b1, w2, b2, io_dtype=jnp.bfloat16))
    assert out.shape == x.shape and out.dtype == jnp.bfloat16
    assert jnp.allclose(out.astype(jnp.float32), ref, atol=2e-1, rtol=5e-2), \
        "bf16-I/O mismatch (H=128, ragged rows)"

    print("KERNEL_OK")
</pallas_src>

<mosaic_0001>
module attributes {stable_mosaic.version = 11 : i64} {
  func.func @_pwff_kernel(%arg0: i32, %arg1: memref<8x32xf32, #tpu.memory_space<vmem>>, %arg2: memref<32x128xf32, #tpu.memory_space<vmem>>, %arg3: memref<1x128xf32, #tpu.memory_space<vmem>>, %arg4: memref<128x128xf32, #tpu.memory_space<vmem>>, %arg5: memref<1x128xf32, #tpu.memory_space<vmem>>, %arg6: memref<8x128xf32, #tpu.memory_space<vmem>>) attributes {dimension_semantics = [#tpu.dimension_semantics<parallel>], iteration_bounds = array<i64: 2>, scalar_prefetch = 0 : i64, scratch_operands = 0 : i64, tpu.core_type = #tpu.core_type<tc>, window_params = [{transform_indices = @transform_0, window_bounds = array<i64: 8, 32>}, {pipeline_mode = #tpu.pipeline_mode<synchronous>, transform_indices = @transform_1, window_bounds = array<i64: 32, 128>}, {pipeline_mode = #tpu.pipeline_mode<synchronous>, transform_indices = @transform_2, window_bounds = array<i64: 1, 128>}, {pipeline_mode = #tpu.pipeline_mode<synchronous>, transform_indices = @transform_3, window_bounds = array<i64: 128, 128>}, {pipeline_mode = #tpu.pipeline_mode<synchronous>, transform_indices = @transform_4, window_bounds = array<i64: 1, 128>}, {transform_indices = @transform_5, window_bounds = array<i64: 8, 128>}]} {
    %c0 = arith.constant 0 : index
    %c0_0 = arith.constant 0 : index
    %0 = vector.load %arg1[%c0, %c0_0] : memref<8x32xf32, #tpu.memory_space<vmem>>, vector<8x32xf32>
    %c0_1 = arith.constant 0 : index
    %c0_2 = arith.constant 0 : index
    %1 = vector.load %arg2[%c0_1, %c0_2] : memref<32x128xf32, #tpu.memory_space<vmem>>, vector<32x128xf32>
    %cst = arith.constant dense<0.000000e+00> : vector<8x128xf32>
    %2 = tpu.matmul %0, %1, %cst {dimension_numbers = #tpu.dot_dimension_numbers<[1], [0], [0], [1], [0, 0, 1, 1], [], []>} : vector<8x32xf32>, vector<32x128xf32>, vector<8x128xf32> -> vector<8x128xf32>
    %c0_3 = arith.constant 0 : index
    %c0_4 = arith.constant 0 : index
    %3 = vector.load %arg3[%c0_3, %c0_4] : memref<1x128xf32, #tpu.memory_space<vmem>>, vector<1x128xf32>
    %4 = vector.broadcast %3 : vector<1x128xf32> to vector<8x128xf32>
    %5 = arith.addf %2, %4 : vector<8x128xf32>
    %cst_5 = arith.constant 0.000000e+00 : f32
    %6 = vector.broadcast %cst_5 : f32 to vector<8x128xf32>
    %7 = arith.maximumf %5, %6 : vector<8x128xf32>
    %c0_6 = arith.constant 0 : index
    %c0_7 = arith.constant 0 : index
    %8 = vector.load %arg4[%c0_6, %c0_7] : memref<128x128xf32, #tpu.memory_space<vmem>>, vector<128x128xf32>
    %cst_8 = arith.constant dense<0.000000e+00> : vector<8x128xf32>
    %9 = tpu.matmul %7, %8, %cst_8 {dimension_numbers = #tpu.dot_dimension_numbers<[1], [0], [0], [1], [0, 0, 1, 1], [], []>} : vector<8x128xf32>, vector<128x128xf32>, vector<8x128xf32> -> vector<8x128xf32>
    %c0_9 = arith.constant 0 : index
    %c0_10 = arith.constant 0 : index
    %10 = vector.load %arg5[%c0_9, %c0_10] : memref<1x128xf32, #tpu.memory_space<vmem>>, vector<1x128xf32>
    %11 = vector.broadcast %10 : vector<1x128xf32> to vector<8x128xf32>
    %12 = arith.addf %9, %11 : vector<8x128xf32>
    %c0_11 = arith.constant 0 : index
    %c0_12 = arith.constant 0 : index
    %13 = vector.load %arg6[%c0_11, %c0_12] : memref<8x128xf32, #tpu.memory_space<vmem>>, vector<8x128xf32>
    tpu.vector_store %arg6[%c0_11, %c0_12], %12 {strides = array<i32>} : memref<8x128xf32, #tpu.memory_space<vmem>>, vector<8x128xf32>,
    %14 = vector.extract_strided_slice %12 {offsets = [0, 0], sizes = [8, 32], strides = [1, 1]} : vector<8x128xf32> to vector<8x32xf32>
    %15 = arith.addf %14, %0 : vector<8x32xf32>
    %c0_13 = arith.constant 0 : index
    %c0_14 = arith.constant 0 : index
    %16 = vector.load %arg6[%c0_13, %c0_14] : memref<8x128xf32, #tpu.memory_space<vmem>>, vector<8x32xf32>
    tpu.vector_store %arg6[%c0_13, %c0_14], %15 {strides = array<i32>} : memref<8x128xf32, #tpu.memory_space<vmem>>, vector<8x32xf32>,
    return
  }
  func.func @transform_0(%arg0: i32) -> (i32, i32) {
    %c0_i32 = arith.constant 0 : i32
    %c0_i32_0 = arith.constant 0 : i32
    return %arg0, %c0_i32 : i32, i32
  }
  func.func @transform_1(%arg0: i32) -> (i32, i32) {
    %c0_i32 = arith.constant 0 : i32
    %c0_i32_0 = arith.constant 0 : i32
    %c0_i32_1 = arith.constant 0 : i32
    return %c0_i32, %c0_i32_0 : i32, i32
  }
  func.func @transform_2(%arg0: i32) -> (i32, i32) {
    %c0_i32 = arith.constant 0 : i32
    %c0_i32_0 = arith.constant 0 : i32
    %c0_i32_1 = arith.constant 0 : i32
    return %c0_i32, %c0_i32_0 : i32, i32
  }
  func.func @transform_3(%arg0: i32) -> (i32, i32) {
    %c0_i32 = arith.constant 0 : i32
    %c0_i32_0 = arith.constant 0 : i32
    %c0_i32_1 = arith.constant 0 : i32
    return %c0_i32, %c0_i32_0 : i32, i32
  }
  func.func @transform_4(%arg0: i32) -> (i32, i32) {
    %c0_i32 = arith.constant 0 : i32
    %c0_i32_0 = arith.constant 0 : i32
    %c0_i32_1 = arith.constant 0 : i32
    return %c0_i32, %c0_i32_0 : i32, i32
  }
  func.func @transform_5(%arg0: i32) -> (i32, i32) {
    %c0_i32 = arith.constant 0 : i32
    %c0_i32_0 = arith.constant 0 : i32
    return %arg0, %c0_i32 : i32, i32
  }
}

</mosaic_0001>

<llo_original>
// kernel: pointwise_feedforward.1
$region0: #{pointwise_feedforward.1}
  #allocation0 [shape = 'u32[]', space=smem, size = 0x4, offset = 0x4, fixed_abs, tag = 'smem constant byte address 0x4 - core index']
  #allocation1 [shape = 'u32[72,128]{1,0:T(1,128)}', space=vmem, size = 0x9000, scoped, tag = 'internal scratch']
  %s0 = inlined_call_operand.vmem [shape: f32[16,32], index: 0, kind: input, shape index: {}]
  %s1 = inlined_call_operand.vmem [shape: f32[32,128], index: 1, kind: input, shape index: {}]
  %s2 = inlined_call_operand.vmem [shape: f32[1,128], index: 2, kind: input, shape index: {}]
  %s3 = inlined_call_operand.vmem [shape: f32[128,128], index: 3, kind: input, shape index: {}]
  %s4 = inlined_call_operand.vmem [shape: f32[1,128], index: 4, kind: input, shape index: {}]
  %s5 = inlined_call_operand.vmem [shape: f32[16,128], index: 5, kind: output, shape index: {}]
  %s6 = sld [smem:[#allocation0]]
  $region53: #{pointwise_feedforward.1} parent=0
    _
  %s8 = ssub.s32 1, %s6
  %s9 = scalar_select 0, %s8, %s6
  loop: start=0, step=1, limit=4
  $region2: #{pointwise_feedforward.1} parent=0 // loop_pre_header
    _
  $region3: #{pointwise_feedforward.1} parent=0 // loop_header
    %s11 = sphi 0, %s15
    %p12 = scmp.ge.s32.totalorder %s11, 4
    %s21 = sphi 0, %s23
    %s24 = sphi 0, %s21
    %s25 = sphi 0, %s24
    %s41 = sphi 0, %s25
    %s45 = sphi 0, %s45
    %s47 = sphi 0, %s45
    %s48 = sphi 0, %s47
    %s62 = sphi 0, %s48
    %s66 = sphi 0, %s66
    %s68 = sphi 0, %s66
    %s69 = sphi 0, %s68
    %s83 = sphi 0, %s69
    %s87 = sphi 0, %s87
    %s89 = sphi 0, %s87
    %s90 = sphi 0, %s89
    %s104 = sphi 0, %s90
    %s108 = sphi 0, %s108
    %s110 = sphi 0, %s108
    %s111 = sphi 0, %s110
    %s125 = sphi 0, %s111
    %s131 = sphi 0, %s133
    %s134 = sphi 0, %s131
    %s135 = sphi 0, %s134
    %s151 = sphi 0, %s135
  $region4: #{pointwise_feedforward.1} parent=0 // loop_header_branch
    %14 = sbr.rel (%p12) target = $region8
  $region5: #{pointwise_feedforward.1} parent=0 // loop_body
    %s16 = ssub.s32 %s11, 1
    %s17 = ssub.s32 %s11, 2
    %s18 = sadd.s32 %s11, 1
    %s19 = ssub.s32 %s11, %s18
    %p20 = scmp.eq.s32.totalorder %s19, 0
    %s22 = sadd.s32 %s21, 1
    %s23 = scalar_select %p20, %s21, %s22
    %p26 = pneg %p20
    %p27 = scmp.eq.s32.totalorder %s11, 1
    %p28 = por %p26, %p27
    %p29 = scmp.ne.s32.totalorder %s21, %s24
    %p30 = scmp.eq.s32.totalorder %s11, 0
    %p31 = por %p29, %p30
    %p32 = scmp.ne.s32.totalorder %s21, %s24
    %p33 = scmp.eq.s32.totalorder %s16, 1
    %p34 = por %p32, %p33
    %p35 = scmp.ne.s32.totalorder %s24, %s25
    %p36 = scmp.eq.s32.totalorder %s16, 0
    %p37 = por %p35, %p36
    %p38 = scmp.ne.s32.totalorder %s24, %s25
    %p39 = scmp.eq.s32.totalorder %s17, 1
    %p40 = por %p38, %p39
    %p42 = scmp.ne.s32.totalorder %s25, %s41
    %p43 = scmp.eq.s32.totalorder %s17, 0
    %p44 = por %p42, %p43
    %s46 = sadd.s32 %s45, 1
    %p49 = scmp.eq.s32.totalorder %s11, 1
    %p50 = scmp.ne.s32.totalorder %s45, %s47
    %p51 = scmp.eq.s32.totalorder %s11, 0
    %p52 = por %p50, %p51
    %p53 = scmp.ne.s32.totalorder %s45, %s47
    %p54 = scmp.eq.s32.totalorder %s16, 1
    %p55 = por %p53, %p54
    %p56 = scmp.ne.s32.totalorder %s47, %s48
    %p57 = scmp.eq.s32.totalorder %s16, 0
    %p58 = por %p56, %p57
    %p59 = scmp.ne.s32.totalorder %s47, %s48
    %p60 = scmp.eq.s32.totalorder %s17, 1
    %p61 = por %p59, %p60
    %p63 = scmp.ne.s32.totalorder %s48, %s62
    %p64 = scmp.eq.s32.totalorder %s17, 0
    %p65 = por %p63, %p64
    %s67 = sadd.s32 %s66, 1
    %p70 = scmp.eq.s32.totalorder %s11, 1
    %p71 = scmp.ne.s32.totalorder %s66, %s68
    %p72 = scmp.eq.s32.totalorder %s11, 0
    %p73 = por %p71, %p72
    %p74 = scmp.ne.s32.totalorder %s66, %s68
    %p75 = scmp.eq.s32.totalorder %s16, 1
    %p76 = por %p74, %p75
    %p77 = scmp.ne.s32.totalorder %s68, %s69
    %p78 = scmp.eq.s32.totalorder %s16, 0
    %p79 = por %p77, %p78
    %p80 = scmp.ne.s32.totalorder %s68, %s69
    %p81 = scmp.eq.s32.totalorder %s17, 1
    %p82 = por %p80, %p81
    %p84 = scmp.ne.s32.totalorder %s69, %s83
    %p85 = scmp.eq.s32.totalorder %s17, 0
    %p86 = por %p84, %p85
    %s88 = sadd.s32 %s87, 1
    %p91 = scmp.eq.s32.totalorder %s11, 1
    %p92 = scmp.ne.s32.totalorder %s87, %s89
    %p93 = scmp.eq.s32.totalorder %s11, 0
    %p94 = por %p92, %p93
    %p95 = scmp.ne.s32.totalorder %s87, %s89
    %p96 = scmp.eq.s32.totalorder %s16, 1
    %p97 = por %p95, %p96
    %p98 = scmp.ne.s32.totalorder %s89, %s90
    %p99 = scmp.eq.s32.totalorder %s16, 0
    %p100 = por %p98, %p99
    %p101 = scmp.ne.s32.totalorder %s89, %s90
    %p102 = scmp.eq.s32.totalorder %s17, 1
    %p103 = por %p101, %p102
    %p105 = scmp.ne.s32.totalorder %s90, %s104
    %p106 = scmp.eq.s32.totalorder %s17, 0
    %p107 = por %p105, %p106
    %s109 = sadd.s32 %s108, 1
    %p112 = scmp.eq.s32.totalorder %s11, 1
    %p113 = scmp.ne.s32.totalorder %s108, %s110
    %p114 = scmp.eq.s32.totalorder %s11, 0
    %p115 = por %p113, %p114
    %p116 = scmp.ne.s32.totalorder %s108, %s110
    %p117 = scmp.eq.s32.totalorder %s16, 1
    %p118 = por %p116, %p117
    %p119 = scmp.ne.s32.totalorder %s110, %s111
    %p120 = scmp.eq.s32.totalorder %s16, 0
    %p121 = por %p119, %p120
    %p122 = scmp.ne.s32.totalorder %s110, %s111
    %p123 = scmp.eq.s32.totalorder %s17, 1
    %p124 = por %p122, %p123
    %p126 = scmp.ne.s32.totalorder %s111, %s125
    %p127 = scmp.eq.s32.totalorder %s17, 0
    %p128 = por %p126, %p127
    %s129 = ssub.s32 %s11, %s18
    %p130 = scmp.eq.s32.totalorder %s129, 0
    %s132 = sadd.s32 %s131, 1
    %s133 = scalar_select %p130, %s131, %s132
    %p136 = pneg %p130
    %p137 = scmp.eq.s32.totalorder %s11, 1
    %p138 = por %p136, %p137
    %p139 = scmp.ne.s32.totalorder %s131, %s134
    %p140 = scmp.eq.s32.totalorder %s11, 0
    %p141 = por %p139, %p140
    %p142 = scmp.ne.s32.totalorder %s131, %s134
    %p143 = scmp.eq.s32.totalorder %s16, 1
    %p144 = por %p142, %p143
    %p145 = scmp.ne.s32.totalorder %s134, %s135
    %p146 = scmp.eq.s32.totalorder %s16, 0
    %p147 = por %p145, %p146
    %p148 = scmp.ne.s32.totalorder %s134, %s135
    %p149 = scmp.eq.s32.totalorder %s17, 1
    %p150 = por %p148, %p149
    %p152 = scmp.ne.s32.totalorder %s135, %s151
    %p153 = scmp.eq.s32.totalorder %s17, 0
    %p154 = por %p152, %p153
    %p155 = scmp.le.s32.totalorder 1, %s11
    %p156 = scmp.lt.s32.totalorder %s11, 3
    %p157 = pnand %p155, %p156
    %p158 = pneg %p157
    // Predicated region
    $region9: #{pointwise_feedforward.1} parent=5 // pred_check
      _
    $region10: #{pointwise_feedforward.1} parent=5 // pred_check_branch
      %160 = sbr.rel (%p157) target = $region12
    $region11: #{pointwise_feedforward.1} parent=5 // pred_region
      %s161 = ssub.s32 %s11, 1
      // Predicated region
      $region13: #{pointwise_feedforward.1} parent=11 // pred_check
        %p162 = pneg %p58
      $region14: #{pointwise_feedforward.1} parent=11 // pred_check_branch
        %164 = sbr.rel (%p162) target = $region16
      $region15: #{pointwise_feedforward.1} parent=11 // pred_region
        _
      $region16: #{pointwise_feedforward.1} parent=11 // pred_fallthru
        _
      // Predicated region
      $region17: #{pointwise_feedforward.1} parent=11 // pred_check
        %p165 = pneg %p79
      $region18: #{pointwise_feedforward.1} parent=11 // pred_check_branch
        %167 = sbr.rel (%p165) target = $region20
      $region19: #{pointwise_feedforward.1} parent=11 // pred_region
        _
      $region20: #{pointwise_feedforward.1} parent=11 // pred_fallthru
        _
      // Predicated region
      $region21: #{pointwise_feedforward.1} parent=11 // pred_check
        %p168 = pneg %p100
      $region22: #{pointwise_feedforward.1} parent=11 // pred_check_branch
        %170 = sbr.rel (%p168) target = $region24
      $region23: #{pointwise_feedforward.1} parent=11 // pred_region
        _
      $region24: #{pointwise_feedforward.1} parent=11 // pred_fallthru
        _
      // Predicated region
      $region25: #{pointwise_feedforward.1} parent=11 // pred_check
        %p171 = pneg %p121
      $region26: #{pointwise_feedforward.1} parent=11 // pred_check_branch
        %173 = sbr.rel (%p171) target = $region28
      $region27: #{pointwise_feedforward.1} parent=11 // pred_region
        _
      $region28: #{pointwise_feedforward.1} parent=11 // pred_fallthru
        _
    $region12: #{pointwise_feedforward.1} parent=5 // pred_fallthru
      _
    %p174 = scmp.lt.s32.totalorder %s11, 2
    // Predicated region
    $region29: #{pointwise_feedforward.1} parent=5 // pred_check
      %p175 = pneg %p174
    $region30: #{pointwise_feedforward.1} parent=5 // pred_check_branch
      %177 = sbr.rel (%p175) target = $region32
    $region31: #{pointwise_feedforward.1} parent=5 // pred_region
      // Predicated region
      $region33: #{pointwise_feedforward.1} parent=31 // pred_check
        %p178 = pneg %p31
      $region34: #{pointwise_feedforward.1} parent=31 // pred_check_branch
        %180 = sbr.rel (%p178) target = $region36
      $region35: #{pointwise_feedforward.1} parent=31 // pred_region
        %p181 = scmp.lt.s32.totalorder %s11, 1
        %s182 = scalar_select %p181, %s11, 1
        %s183 = smul.addr %s182, 8
        %s184 = scalar_lea.vmem %s0, %s183
      $region36: #{pointwise_feedforward.1} parent=31 // pred_fallthru
        _
    $region32: #{pointwise_feedforward.1} parent=5 // pred_fallthru
      _
    %p185 = scmp.le.s32.totalorder 1, %s11
    %p186 = scmp.lt.s32.totalorder %s11, 3
    %p187 = pnand %p185, %p186
    %p188 = pneg %p187
    // Predicated region
    $region37: #{pointwise_feedforward.1} parent=5 // pred_check
      _
    $region38: #{pointwise_feedforward.1} parent=5 // pred_check_branch
      %190 = sbr.rel (%p187) target = $region40
    $region39: #{pointwise_feedforward.1} parent=5 // pred_region
      %s191 = ssub.s32 %s11, 1
      %p192 = scmp.lt.s32.totalorder %s16, 1
      %s193 = scalar_select %p192, %s16, 1
      %s194 = smul.addr %s193, 8
      %s195 = scalar_lea.vmem %s0, %s194
      %p196 = pneg %p37
      %p197 = pneg %p34
      %p198 = pneg %p58
      %p199 = pneg %p55
      %p200 = pneg %p79
      %p201 = pneg %p76
      %p202 = pneg %p100
      %p203 = pneg %p97
      %p204 = pneg %p121
      %p205 = pneg %p118
      %p206 = pneg %p147
      %p207 = pneg %p144
      %p208 = scmp.lt.s32.totalorder %s16, 1
      %s209 = scalar_select %p208, %s16, 1
      %s210 = smul.addr %s209, 8
      %s211 = scalar_lea.vmem %s5, %s210
      %p212 = scmp.lt.s32.totalorder %s16, 1
      %s213 = scalar_select %p212, %s16, 1
      %s214 = smul.addr %s213, 8
      %s215 = scalar_lea.vmem %s0, %s214
      %p216 = scmp.lt.s32.totalorder %s16, 1
      %s217 = scalar_select %p216, %s16, 1
      %s218 = smul.addr %s217, 8
      %s219 = scalar_lea.vmem %s5, %s218
      %v220 = vld [vmem:[%s215] sm:$0xff]
      %v221 = vld [vmem:[%s1] sm:$0xff]
      %v222 = vld [vmem:[%s1 + $0x8] sm:$0xff]
      %v223 = vld [vmem:[%s1 + $0x10] sm:$0xff]
      %v224 = vld [vmem:[%s1 + $0x18] sm:$0xff]
      %v225 = vld [vmem:[%s2] sm:$0x1]
      %v227 = vperm.slane %v225, 0
      %vm229 = vcmask 261120
      %v231 = vsel %vm229, %v220, 0
      %233 = vmatpush.msra.mxu0 0.0
      %234 = vmatpush.msra.mxu0 0.0
      %235 = vmatpush.msra.mxu0 0.0
      %236 = vmatpush.msra.mxu0 0.0
      %237 = vmatpush.msra.mxu0 0.0
      %238 = vmatpush.msra.mxu0 0.0
      %239 = vmatpush.msra.mxu0 0.0
      %240 = vmatpush.msra.mxu0 0.0
      %241 = vmatpush.msra.mxu0 0.0
      %242 = vmatpush.msra.mxu0 0.0
      %243 = vmatpush.msra.mxu0 0.0
      %244 = vmatpush.msra.mxu0 0.0
      %245 = vmatpush.msra.mxu0 %v224
      %246 = vmatpush.msra.mxu0 %v223
      %247 = vmatpush.msra.mxu0 %v222
      %248 = vmatpush.msra.mxu0 %v221
      %249 = vmatmul.f32.gmra.mxu0 %v231
      %v250 = vpop.f32.mrf.mxu0
      %v251 = vadd.f32 %v227, %v250
      %252 = vdwg.mxu0
      %v253 = vmax.f32 %v251, 0.0
      %v254 = vld [vmem:[%s3] sm:$0xff]
      %v255 = vld [vmem:[%s3 + $0x8] sm:$0xff]
      %v256 = vld [vmem:[%s3 + $0x10] sm:$0xff]
      %v257 = vld [vmem:[%s3 + $0x18] sm:$0xff]
      %v258 = vld [vmem:[%s3 + $0x20] sm:$0xff]
      %v259 = vld [vmem:[%s3 + $0x28] sm:$0xff]
      %v260 = vld [vmem:[%s3 + $0x30] sm:$0xff]
      %v261 = vld [vmem:[%s3 + $0x38] sm:$0xff]
      %v262 = vld [vmem:[%s3 + $0x40] sm:$0xff]
      %v263 = vld [vmem:[%s3 + $0x48] sm:$0xff]
      %v264 = vld [vmem:[%s3 + $0x50] sm:$0xff]
      %v265 = vld [vmem:[%s3 + $0x58] sm:$0xff]
      %v266 = vld [vmem:[%s3 + $0x60] sm:$0xff]
      %v267 = vld [vmem:[%s3 + $0x68] sm:$0xff]
      %v268 = vld [vmem:[%s3 + $0x70] sm:$0xff]
      %v269 = vld [vmem:[%s3 + $0x78] sm:$0xff]
      %v270 = vld [vmem:[%s4] sm:$0x1]
      %v272 = vperm.slane %v270, 0
      %274 = vmatpush.msra.mxu0 %v269
      %275 = vmatpush.msra.mxu0 %v268
      %276 = vmatpush.msra.mxu0 %v267
      %277 = vmatpush.msra.mxu0 %v266
      %278 = vmatpush.msra.mxu0 %v265
      %279 = vmatpush.msra.mxu0 %v264
      %280 = vmatpush.msra.mxu0 %v263
      %281 = vmatpush.msra.mxu0 %v262
      %282 = vmatpush.msra.mxu0 %v261
      %283 = vmatpush.msra.mxu0 %v260
      %284 = vmatpush.msra.mxu0 %v259
      %285 = vmatpush.msra.mxu0 %v258
      %286 = vmatpush.msra.mxu0 %v257
      %287 = vmatpush.msra.mxu0 %v256
      %288 = vmatpush.msra.mxu0 %v255
      %289 = vmatpush.msra.mxu0 %v254
      %290 = vmatmul.f32.gmra.mxu0 %v253
      %v291 = vpop.f32.mrf.mxu0
      %v292 = vadd.f32 %v272, %v291
      %293 = vdwg.mxu0
      %294 = vst [vmem:[%s219] sm:$0xff] %v292
      %v295 = vadd.f32 %v292, %v220
      %296 = vst.msk [vmem:[%s219] sm:$0xff] %vm229, %v295
      %p297 = scmp.lt.s32.totalorder %s16, 1
      %s298 = scalar_select %p297, %s16, 1
      %s299 = smul.addr %s298, 8
      %s300 = scalar_lea.vmem %s5, %s299
      // Predicated region
      $region41: #{pointwise_feedforward.1} parent=39 // pred_check
        %p301 = pneg %p144
      $region42: #{pointwise_feedforward.1} parent=39 // pred_check_branch
        %303 = sbr.rel (%p301) target = $region44
      $region43: #{pointwise_feedforward.1} parent=39 // pred_region
        _
      $region44: #{pointwise_feedforward.1} parent=39 // pred_fallthru
        _
    $region40: #{pointwise_feedforward.1} parent=5 // pred_fallthru
      _
    %p304 = scmp.le.s32.totalorder 2, %s11
    // Predicated region
    $region45: #{pointwise_feedforward.1} parent=5 // pred_check
      %p305 = pneg %p304
    $region46: #{pointwise_feedforward.1} parent=5 // pred_check_branch
      %307 = sbr.rel (%p305) target = $region48
    $region47: #{pointwise_feedforward.1} parent=5 // pred_region
      %s308 = ssub.s32 %s11, 2
      // Predicated region
      $region49: #{pointwise_feedforward.1} parent=47 // pred_check
        %p309 = pneg %p150
      $region50: #{pointwise_feedforward.1} parent=47 // pred_check_branch
        %311 = sbr.rel (%p309) target = $region52
      $region51: #{pointwise_feedforward.1} parent=47 // pred_region
        %p312 = scmp.lt.s32.totalorder %s17, 1
        %s313 = scalar_select %p312, %s17, 1
        %s314 = smul.addr %s313, 8
        %s315 = scalar_lea.vmem %s5, %s314
      $region52: #{pointwise_feedforward.1} parent=47 // pred_fallthru
        _
    $region48: #{pointwise_feedforward.1} parent=5 // pred_fallthru
      _
  $region6: #{pointwise_feedforward.1} parent=0 // loop_footer
    %s15 = sadd.s32 1, %s11
  $region7: #{pointwise_feedforward.1} parent=0 // loop_footer_branch
    %10 = sbr.rel target = $region3
  $region8: #{pointwise_feedforward.1} parent=0 // loop_exit
    _

</llo_original>
